<compile_context>
chip_gen: v7x
topology: tpu7x:2x2x1
jax: 0.10.0
libtpu: 0.0.40
codegen_flags: <defaults>
</compile_context>

<pallas_src>
import functools

import jax
import jax.numpy as jnp
from jax.experimental import pallas as pl
from jax.experimental.pallas import tpu as pltpu


def ann_kernel(x_ref, w1_ref, b1_ref, w2_ref, b2_ref, o_ref, *,
               matmul_dtype, approx_sigmoid):
    # Cast activations to the MXU operand dtype in-kernel (free under slack).
    x = x_ref[...].astype(matmul_dtype)

    # hidden = relu(x @ W1t + b1); W1t is (in, hid) so contraction is ((1,),(0,)).
    h = jnp.dot(x, w1_ref[...], preferred_element_type=jnp.float32)
    h = jnp.maximum(h + b1_ref[...], 0.0)                 # bias + ReLU in f32

    # out = sigmoid(h @ W2t + b2); W2t is (hid, out).
    z = jnp.dot(h.astype(matmul_dtype), w2_ref[...],
                preferred_element_type=jnp.float32)
    z = z + b2_ref[...]
    if approx_sigmoid:
        # exp + reciprocal both on the EUP slot (approx vrcp, ~1e-3 rel err).
        o_ref[...] = pl.reciprocal(1.0 + jnp.exp(-z), approx=True)
    else:
        o_ref[...] = jax.nn.sigmoid(z)


def _round_up(n: int, m: int) -> int:
    return ((n + m - 1) // m) * m


@functools.partial(jax.jit,
                   static_argnames=("matmul_dtype", "tile_b", "approx_sigmoid"))
def ann_forward(x, w1, b1, w2, b2, *, matmul_dtype=jnp.float32, tile_b=512,
                approx_sigmoid=False):
    """Fused forward pass matching torch.nn.Linear layouts.

    x  : (B, input_size)              float32
    w1 : (hidden_size, input_size)    PyTorch Linear layout (NOT transposed)
    b1 : (hidden_size,)
    w2 : (output_size, hidden_size)   PyTorch Linear layout (NOT transposed)
    b2 : (output_size,)
    matmul_dtype : MXU operand dtype. jnp.bfloat16 recommended on v5e/v6e/v7x
                   (halves weight/activation MXU bytes, doubles MXU rate);
                   elementwise math and accumulation stay f32.
    approx_sigmoid : use EUP approx reciprocal for the sigmoid (small rel err).
    returns (B, output_size) float32
    """
    x = jnp.asarray(x, jnp.float32)
    B, in_size = x.shape
    hid = w1.shape[0]
    out_size = w2.shape[0]

    # --- Output feature dim: lane-pad only when it pays off -----------------
    # For tiny out_size (e.g. 16) the 8x write amplification + extra slice
    # pass lose; for large non-aligned out_size lane-dense stores win.
    pad_lanes = (out_size > 128) and (out_size % 128 != 0)
    out_dim = _round_up(out_size, 128) if pad_lanes else out_size

    # --- One-time weight prep (tiny tensors): transpose + cast + pad --------
    w1t = jnp.asarray(w1, jnp.float32).T                    # (in, hid)
    w2t = jnp.asarray(w2, jnp.float32).T                    # (hid, out)
    b2p = jnp.asarray(b2, jnp.float32)
    if out_dim != out_size:
        w2t = jnp.pad(w2t, ((0, 0), (0, out_dim - out_size)))
        b2p = jnp.pad(b2p, (0, out_dim - out_size))
    w1t = w1t.astype(matmul_dtype)
    w2t = w2t.astype(matmul_dtype)
    b1r = jnp.asarray(b1, jnp.float32).reshape(1, hid)
    b2r = b2p.reshape(1, out_dim)

    # --- Batch tiling: aim for >= 2 even tiles (v7x dual-TC), cap at tile_b --
    if B <= 8:
        tb = 8
    else:
        tb = min(tile_b, _round_up((B + 1) // 2, 8))
    B_pad = _round_up(B, tb)
    # Only pad when actually needed -> no extra HBM pass in the common case.
    x_p = x if B_pad == B else jnp.pad(x, ((0, B_pad - B), (0, 0)))

    grid = (B_pad // tb,)
    dsz = jnp.dtype(matmul_dtype).itemsize

    # Advisory cost estimate (x is read as f32; weights at matmul_dtype).
    cost = pl.CostEstimate(
        flops=2 * B_pad * (in_size * hid + hid * out_dim),
        transcendentals=B_pad * out_dim,                    # sigmoid exp
        bytes_accessed=(4 * B_pad * in_size
                        + dsz * (in_size * hid + hid * out_dim)
                        + 4 * (hid + out_dim)
                        + 4 * B_pad * out_dim),
    )

    # Explicit VMEM budget: weights (VMEM-resident) + double-buffered
    # activation/output tiles + f32 hidden temp, with generous headroom.
    weight_bytes = dsz * (in_size * hid + hid * out_dim) + 4 * (hid + out_dim)
    act_bytes = 4 * tb * (in_size + out_dim + hid)
    vmem_limit = int(min(64 * 2**20, max(8 * 2**20, 4 * (weight_bytes + act_bytes))))

    kernel = functools.partial(ann_kernel,
                               matmul_dtype=matmul_dtype,
                               approx_sigmoid=approx_sigmoid)

    out = pl.pallas_call(
        kernel,
        out_shape=jax.ShapeDtypeStruct((B_pad, out_dim), jnp.float32),
        grid=grid,
        in_specs=[
            # Activations: one batch tile per grid step (pipelined DMA), f32.
            pl.BlockSpec((tb, in_size), lambda i: (i, 0)),
            # Weights / biases: constant index_map -> loaded once, VMEM-resident.
            pl.BlockSpec((in_size, hid), lambda i: (0, 0)),
            pl.BlockSpec((1, hid), lambda i: (0, 0)),
            pl.BlockSpec((hid, out_dim), lambda i: (0, 0)),
            pl.BlockSpec((1, out_dim), lambda i: (0, 0)),
        ],
        out_specs=pl.BlockSpec((tb, out_dim), lambda i: (i, 0)),
        compiler_params=pltpu.CompilerParams(
            dimension_semantics=("parallel",),   # shard batch tiles across TCs
            vmem_limit_bytes=vmem_limit,
        ),
        cost_estimate=cost,
    )(x_p, w1t, b1r, w2t, b2r)

    # Drop padding only if any was added (usually a no-op).
    if B_pad != B:
        out = out[:B]
    if out_dim != out_size:
        out = out[:, :out_size]
    return out


if __name__ == "__main__":
    # Small shapes consistent with the module: Linear(input->hidden), Linear(hidden->output).
    batch_size = 256      # -> 2 batch tiles of 128 (even grid for v7x megacore)
    input_size = 32
    hidden_size = 32
    output_size = 16

    key = jax.random.PRNGKey(0)
    kx, kw1, kb1, kw2, kb2 = jax.random.split(key, 5)

    # Parameter init mirroring reset_parameters(): weights ~ Normal(0, 1)
    # (torch.nn.init.normal_), biases keep Linear's default
    # Uniform(-1/sqrt(fan_in), 1/sqrt(fan_in)).
    x = jax.random.normal(kx, (batch_size, input_size), dtype=jnp.float32)
    w1 = jax.random.normal(kw1, (hidden_size, input_size), dtype=jnp.float32)
    b1 = jax.random.uniform(kb1, (hidden_size,), dtype=jnp.float32,
                            minval=-1.0 / jnp.sqrt(input_size),
                            maxval=1.0 / jnp.sqrt(input_size))
    w2 = jax.random.normal(kw2, (output_size, hidden_size), dtype=jnp.float32)
    b2 = jax.random.uniform(kb2, (output_size,), dtype=jnp.float32,
                            minval=-1.0 / jnp.sqrt(hidden_size),
                            maxval=1.0 / jnp.sqrt(hidden_size))

    # Reference in plain JAX (same math as the PyTorch Sequential).
    h_ref = jnp.maximum(x @ w1.T + b1, 0.0)
    ref = jax.nn.sigmoid(h_ref @ w2.T + b2)

    # Exact f32 MXU path.
    out = ann_forward(x, w1, b1, w2, b2)
    out = jax.block_until_ready(out)
    assert out.shape == (batch_size, output_size)
    assert jnp.allclose(out, ref, atol=1e-5, rtol=1e-5)

    # bf16 MXU operands + approx EUP sigmoid (recommended fast mode on all gens).
    out_bf16 = ann_forward(x, w1, b1, w2, b2,
                           matmul_dtype=jnp.bfloat16, approx_sigmoid=True)
    out_bf16 = jax.block_until_ready(out_bf16)
    assert out_bf16.shape == (batch_size, output_size)
    assert jnp.allclose(out_bf16, ref, atol=1e-1, rtol=1e-1)

    print("KERNEL_OK")
</pallas_src>

<mosaic_0001>
module attributes {stable_mosaic.version = 11 : i64} {
  func.func @ann_kernel(%arg0: i32, %arg1: memref<128x32xf32, #tpu.memory_space<vmem>>, %arg2: memref<32x32xf32, #tpu.memory_space<vmem>>, %arg3: memref<1x32xf32, #tpu.memory_space<vmem>>, %arg4: memref<32x16xf32, #tpu.memory_space<vmem>>, %arg5: memref<1x16xf32, #tpu.memory_space<vmem>>, %arg6: memref<128x16xf32, #tpu.memory_space<vmem>>) attributes {dimension_semantics = [#tpu.dimension_semantics<parallel>], iteration_bounds = array<i64: 2>, scalar_prefetch = 0 : i64, scratch_operands = 0 : i64, tpu.core_type = #tpu.core_type<tc>, window_params = [{transform_indices = @transform_0, window_bounds = array<i64: 128, 32>}, {pipeline_mode = #tpu.pipeline_mode<synchronous>, transform_indices = @transform_1, window_bounds = array<i64: 32, 32>}, {pipeline_mode = #tpu.pipeline_mode<synchronous>, transform_indices = @transform_2, window_bounds = array<i64: 1, 32>}, {pipeline_mode = #tpu.pipeline_mode<synchronous>, transform_indices = @transform_3, window_bounds = array<i64: 32, 16>}, {pipeline_mode = #tpu.pipeline_mode<synchronous>, transform_indices = @transform_4, window_bounds = array<i64: 1, 16>}, {transform_indices = @transform_5, window_bounds = array<i64: 128, 16>}]} {
    %c0 = arith.constant 0 : index
    %c0_0 = arith.constant 0 : index
    %0 = vector.load %arg1[%c0, %c0_0] : memref<128x32xf32, #tpu.memory_space<vmem>>, vector<128x32xf32>
    %c0_1 = arith.constant 0 : index
    %c0_2 = arith.constant 0 : index
    %1 = vector.load %arg2[%c0_1, %c0_2] : memref<32x32xf32, #tpu.memory_space<vmem>>, vector<32x32xf32>
    %cst = arith.constant dense<0.000000e+00> : vector<128x32xf32>
    %2 = tpu.matmul %0, %1, %cst {dimension_numbers = #tpu.dot_dimension_numbers<[1], [0], [0], [1], [0, 0, 1, 1], [], []>} : vector<128x32xf32>, vector<32x32xf32>, vector<128x32xf32> -> vector<128x32xf32>
    %c0_3 = arith.constant 0 : index
    %c0_4 = arith.constant 0 : index
    %3 = vector.load %arg3[%c0_3, %c0_4] : memref<1x32xf32, #tpu.memory_space<vmem>>, vector<1x32xf32>
    %4 = vector.broadcast %3 : vector<1x32xf32> to vector<128x32xf32>
    %5 = arith.addf %2, %4 : vector<128x32xf32>
    %cst_5 = arith.constant 0.000000e+00 : f32
    %6 = vector.broadcast %cst_5 : f32 to vector<128x32xf32>
    %7 = arith.maximumf %5, %6 : vector<128x32xf32>
    %c0_6 = arith.constant 0 : index
    %c0_7 = arith.constant 0 : index
    %8 = vector.load %arg4[%c0_6, %c0_7] : memref<32x16xf32, #tpu.memory_space<vmem>>, vector<32x16xf32>
    %cst_8 = arith.constant dense<0.000000e+00> : vector<128x16xf32>
    %9 = tpu.matmul %7, %8, %cst_8 {dimension_numbers = #tpu.dot_dimension_numbers<[1], [0], [0], [1], [0, 0, 1, 1], [], []>} : vector<128x32xf32>, vector<32x16xf32>, vector<128x16xf32> -> vector<128x16xf32>
    %c0_9 = arith.constant 0 : index
    %c0_10 = arith.constant 0 : index
    %10 = vector.load %arg5[%c0_9, %c0_10] : memref<1x16xf32, #tpu.memory_space<vmem>>, vector<1x16xf32>
    %11 = vector.broadcast %10 : vector<1x16xf32> to vector<128x16xf32>
    %12 = arith.addf %9, %11 : vector<128x16xf32>
    %13 = arith.negf %12 : vector<128x16xf32>
    %14 = math.exp %13 : vector<128x16xf32>
    %cst_11 = arith.constant 1.000000e+00 : f32
    %15 = vector.broadcast %cst_11 : f32 to vector<128x16xf32>
    %16 = arith.addf %15, %14 : vector<128x16xf32>
    %17 = arith.divf %15, %16 : vector<128x16xf32>
    %c0_12 = arith.constant 0 : index
    %c0_13 = arith.constant 0 : index
    %18 = vector.load %arg6[%c0_12, %c0_13] : memref<128x16xf32, #tpu.memory_space<vmem>>, vector<128x16xf32>
    tpu.vector_store %arg6[%c0_12, %c0_13], %17 {strides = array<i32>} : memref<128x16xf32, #tpu.memory_space<vmem>>, vector<128x16xf32>,
    return
  }
  func.func @transform_0(%arg0: i32) -> (i32, i32) {
    %c0_i32 = arith.constant 0 : i32
    %c0_i32_0 = arith.constant 0 : i32
    return %arg0, %c0_i32 : i32, i32
  }
  func.func @transform_1(%arg0: i32) -> (i32, i32) {
    %c0_i32 = arith.constant 0 : i32
    %c0_i32_0 = arith.constant 0 : i32
    %c0_i32_1 = arith.constant 0 : i32
    return %c0_i32, %c0_i32_0 : i32, i32
  }
  func.func @transform_2(%arg0: i32) -> (i32, i32) {
    %c0_i32 = arith.constant 0 : i32
    %c0_i32_0 = arith.constant 0 : i32
    %c0_i32_1 = arith.constant 0 : i32
    return %c0_i32, %c0_i32_0 : i32, i32
  }
  func.func @transform_3(%arg0: i32) -> (i32, i32) {
    %c0_i32 = arith.constant 0 : i32
    %c0_i32_0 = arith.constant 0 : i32
    %c0_i32_1 = arith.constant 0 : i32
    return %c0_i32, %c0_i32_0 : i32, i32
  }
  func.func @transform_4(%arg0: i32) -> (i32, i32) {
    %c0_i32 = arith.constant 0 : i32
    %c0_i32_0 = arith.constant 0 : i32
    %c0_i32_1 = arith.constant 0 : i32
    return %c0_i32, %c0_i32_0 : i32, i32
  }
  func.func @transform_5(%arg0: i32) -> (i32, i32) {
    %c0_i32 = arith.constant 0 : i32
    %c0_i32_0 = arith.constant 0 : i32
    return %arg0, %c0_i32 : i32, i32
  }
}

</mosaic_0001>

<llo_original>
// kernel: ann_forward.1
$region0: #{ann_forward.1}
  #allocation0 [shape = 'u32[]', space=smem, size = 0x4, offset = 0x4, fixed_abs, tag = 'smem constant byte address 0x4 - core index']
  #allocation1 [shape = 'u32[144,128]{1,0:T(1,128)}', space=vmem, size = 0x12000, scoped, tag = 'internal scratch']
  %s0 = inlined_call_operand.vmem [shape: f32[256,32], index: 0, kind: input, shape index: {}]
  %s1 = inlined_call_operand.vmem [shape: f32[32,32], index: 1, kind: input, shape index: {}]
  %s2 = inlined_call_operand.vmem [shape: f32[1,32], index: 2, kind: input, shape index: {}]
  %s3 = inlined_call_operand.vmem [shape: f32[32,16], index: 3, kind: input, shape index: {}]
  %s4 = inlined_call_operand.vmem [shape: f32[1,16], index: 4, kind: input, shape index: {}]
  %s5 = inlined_call_operand.vmem [shape: f32[256,16], index: 5, kind: output, shape index: {}]
  %s6 = sld [smem:[#allocation0]]
  $region53: #{ann_forward.1} parent=0
    _
  %s8 = ssub.s32 1, %s6
  %s9 = scalar_select 0, %s8, %s6
  loop: start=0, step=1, limit=4
  $region2: #{ann_forward.1} parent=0 // loop_pre_header
    _
  $region3: #{ann_forward.1} parent=0 // loop_header
    %s11 = sphi 0, %s15
    %p12 = scmp.ge.s32.totalorder %s11, 4
    %s21 = sphi 0, %s23
    %s24 = sphi 0, %s21
    %s25 = sphi 0, %s24
    %s41 = sphi 0, %s25
    %s45 = sphi 0, %s45
    %s47 = sphi 0, %s45
    %s48 = sphi 0, %s47
    %s62 = sphi 0, %s48
    %s66 = sphi 0, %s66
    %s68 = sphi 0, %s66
    %s69 = sphi 0, %s68
    %s83 = sphi 0, %s69
    %s87 = sphi 0, %s87
    %s89 = sphi 0, %s87
    %s90 = sphi 0, %s89
    %s104 = sphi 0, %s90
    %s108 = sphi 0, %s108
    %s110 = sphi 0, %s108
    %s111 = sphi 0, %s110
    %s125 = sphi 0, %s111
    %s131 = sphi 0, %s133
    %s134 = sphi 0, %s131
    %s135 = sphi 0, %s134
    %s151 = sphi 0, %s135
  $region4: #{ann_forward.1} parent=0 // loop_header_branch
    %14 = sbr.rel (%p12) target = $region8
  $region5: #{ann_forward.1} parent=0 // loop_body
    %s16 = ssub.s32 %s11, 1
    %s17 = ssub.s32 %s11, 2
    %s18 = sadd.s32 %s11, 1
    %s19 = ssub.s32 %s11, %s18
    %p20 = scmp.eq.s32.totalorder %s19, 0
    %s22 = sadd.s32 %s21, 1
    %s23 = scalar_select %p20, %s21, %s22
    %p26 = pneg %p20
    %p27 = scmp.eq.s32.totalorder %s11, 1
    %p28 = por %p26, %p27
    %p29 = scmp.ne.s32.totalorder %s21, %s24
    %p30 = scmp.eq.s32.totalorder %s11, 0
    %p31 = por %p29, %p30
    %p32 = scmp.ne.s32.totalorder %s21, %s24
    %p33 = scmp.eq.s32.totalorder %s16, 1
    %p34 = por %p32, %p33
    %p35 = scmp.ne.s32.totalorder %s24, %s25
    %p36 = scmp.eq.s32.totalorder %s16, 0
    %p37 = por %p35, %p36
    %p38 = scmp.ne.s32.totalorder %s24, %s25
    %p39 = scmp.eq.s32.totalorder %s17, 1
    %p40 = por %p38, %p39
    %p42 = scmp.ne.s32.totalorder %s25, %s41
    %p43 = scmp.eq.s32.totalorder %s17, 0
    %p44 = por %p42, %p43
    %s46 = sadd.s32 %s45, 1
    %p49 = scmp.eq.s32.totalorder %s11, 1
    %p50 = scmp.ne.s32.totalorder %s45, %s47
    %p51 = scmp.eq.s32.totalorder %s11, 0
    %p52 = por %p50, %p51
    %p53 = scmp.ne.s32.totalorder %s45, %s47
    %p54 = scmp.eq.s32.totalorder %s16, 1
    %p55 = por %p53, %p54
    %p56 = scmp.ne.s32.totalorder %s47, %s48
    %p57 = scmp.eq.s32.totalorder %s16, 0
    %p58 = por %p56, %p57
    %p59 = scmp.ne.s32.totalorder %s47, %s48
    %p60 = scmp.eq.s32.totalorder %s17, 1
    %p61 = por %p59, %p60
    %p63 = scmp.ne.s32.totalorder %s48, %s62
    %p64 = scmp.eq.s32.totalorder %s17, 0
    %p65 = por %p63, %p64
    %s67 = sadd.s32 %s66, 1
    %p70 = scmp.eq.s32.totalorder %s11, 1
    %p71 = scmp.ne.s32.totalorder %s66, %s68
    %p72 = scmp.eq.s32.totalorder %s11, 0
    %p73 = por %p71, %p72
    %p74 = scmp.ne.s32.totalorder %s66, %s68
    %p75 = scmp.eq.s32.totalorder %s16, 1
    %p76 = por %p74, %p75
    %p77 = scmp.ne.s32.totalorder %s68, %s69
    %p78 = scmp.eq.s32.totalorder %s16, 0
    %p79 = por %p77, %p78
    %p80 = scmp.ne.s32.totalorder %s68, %s69
    %p81 = scmp.eq.s32.totalorder %s17, 1
    %p82 = por %p80, %p81
    %p84 = scmp.ne.s32.totalorder %s69, %s83
    %p85 = scmp.eq.s32.totalorder %s17, 0
    %p86 = por %p84, %p85
    %s88 = sadd.s32 %s87, 1
    %p91 = scmp.eq.s32.totalorder %s11, 1
    %p92 = scmp.ne.s32.totalorder %s87, %s89
    %p93 = scmp.eq.s32.totalorder %s11, 0
    %p94 = por %p92, %p93
    %p95 = scmp.ne.s32.totalorder %s87, %s89
    %p96 = scmp.eq.s32.totalorder %s16, 1
    %p97 = por %p95, %p96
    %p98 = scmp.ne.s32.totalorder %s89, %s90
    %p99 = scmp.eq.s32.totalorder %s16, 0
    %p100 = por %p98, %p99
    %p101 = scmp.ne.s32.totalorder %s89, %s90
    %p102 = scmp.eq.s32.totalorder %s17, 1
    %p103 = por %p101, %p102
    %p105 = scmp.ne.s32.totalorder %s90, %s104
    %p106 = scmp.eq.s32.totalorder %s17, 0
    %p107 = por %p105, %p106
    %s109 = sadd.s32 %s108, 1
    %p112 = scmp.eq.s32.totalorder %s11, 1
    %p113 = scmp.ne.s32.totalorder %s108, %s110
    %p114 = scmp.eq.s32.totalorder %s11, 0
    %p115 = por %p113, %p114
    %p116 = scmp.ne.s32.totalorder %s108, %s110
    %p117 = scmp.eq.s32.totalorder %s16, 1
    %p118 = por %p116, %p117
    %p119 = scmp.ne.s32.totalorder %s110, %s111
    %p120 = scmp.eq.s32.totalorder %s16, 0
    %p121 = por %p119, %p120
    %p122 = scmp.ne.s32.totalorder %s110, %s111
    %p123 = scmp.eq.s32.totalorder %s17, 1
    %p124 = por %p122, %p123
    %p126 = scmp.ne.s32.totalorder %s111, %s125
    %p127 = scmp.eq.s32.totalorder %s17, 0
    %p128 = por %p126, %p127
    %s129 = ssub.s32 %s11, %s18
    %p130 = scmp.eq.s32.totalorder %s129, 0
    %s132 = sadd.s32 %s131, 1
    %s133 = scalar_select %p130, %s131, %s132
    %p136 = pneg %p130
    %p137 = scmp.eq.s32.totalorder %s11, 1
    %p138 = por %p136, %p137
    %p139 = scmp.ne.s32.totalorder %s131, %s134
    %p140 = scmp.eq.s32.totalorder %s11, 0
    %p141 = por %p139, %p140
    %p142 = scmp.ne.s32.totalorder %s131, %s134
    %p143 = scmp.eq.s32.totalorder %s16, 1
    %p144 = por %p142, %p143
    %p145 = scmp.ne.s32.totalorder %s134, %s135
    %p146 = scmp.eq.s32.totalorder %s16, 0
    %p147 = por %p145, %p146
    %p148 = scmp.ne.s32.totalorder %s134, %s135
    %p149 = scmp.eq.s32.totalorder %s17, 1
    %p150 = por %p148, %p149
    %p152 = scmp.ne.s32.totalorder %s135, %s151
    %p153 = scmp.eq.s32.totalorder %s17, 0
    %p154 = por %p152, %p153
    %p155 = scmp.le.s32.totalorder 1, %s11
    %p156 = scmp.lt.s32.totalorder %s11, 3
    %p157 = pnand %p155, %p156
    %p158 = pneg %p157
    // Predicated region
    $region9: #{ann_forward.1} parent=5 // pred_check
      _
    $region10: #{ann_forward.1} parent=5 // pred_check_branch
      %160 = sbr.rel (%p157) target = $region12
    $region11: #{ann_forward.1} parent=5 // pred_region
      %s161 = ssub.s32 %s11, 1
      // Predicated region
      $region13: #{ann_forward.1} parent=11 // pred_check
        %p162 = pneg %p58
      $region14: #{ann_forward.1} parent=11 // pred_check_branch
        %164 = sbr.rel (%p162) target = $region16
      $region15: #{ann_forward.1} parent=11 // pred_region
        _
      $region16: #{ann_forward.1} parent=11 // pred_fallthru
        _
      // Predicated region
      $region17: #{ann_forward.1} parent=11 // pred_check
        %p165 = pneg %p79
      $region18: #{ann_forward.1} parent=11 // pred_check_branch
        %167 = sbr.rel (%p165) target = $region20
      $region19: #{ann_forward.1} parent=11 // pred_region
        _
      $region20: #{ann_forward.1} parent=11 // pred_fallthru
        _
      // Predicated region
      $region21: #{ann_forward.1} parent=11 // pred_check
        %p168 = pneg %p100
      $region22: #{ann_forward.1} parent=11 // pred_check_branch
        %170 = sbr.rel (%p168) target = $region24
      $region23: #{ann_forward.1} parent=11 // pred_region
        _
      $region24: #{ann_forward.1} parent=11 // pred_fallthru
        _
      // Predicated region
      $region25: #{ann_forward.1} parent=11 // pred_check
        %p171 = pneg %p121
      $region26: #{ann_forward.1} parent=11 // pred_check_branch
        %173 = sbr.rel (%p171) target = $region28
      $region27: #{ann_forward.1} parent=11 // pred_region
        _
      $region28: #{ann_forward.1} parent=11 // pred_fallthru
        _
    $region12: #{ann_forward.1} parent=5 // pred_fallthru
      _
    %p174 = scmp.lt.s32.totalorder %s11, 2
    // Predicated region
    $region29: #{ann_forward.1} parent=5 // pred_check
      %p175 = pneg %p174
    $region30: #{ann_forward.1} parent=5 // pred_check_branch
      %177 = sbr.rel (%p175) target = $region32
    $region31: #{ann_forward.1} parent=5 // pred_region
      // Predicated region
      $region33: #{ann_forward.1} parent=31 // pred_check
        %p178 = pneg %p31
      $region34: #{ann_forward.1} parent=31 // pred_check_branch
        %180 = sbr.rel (%p178) target = $region36
      $region35: #{ann_forward.1} parent=31 // pred_region
        %s181 = smul.u32 16, %s11
        %p182 = scmp.lt.s32.totalorder %s181, 31
        %s183 = scalar_select %p182, %s181, 31
        %s184 = smul.addr %s183, 8
        %s185 = scalar_lea.vmem %s0, %s184
        %s186 = smul.u32 16, %s11
      $region36: #{ann_forward.1} parent=31 // pred_fallthru
        _
    $region32: #{ann_forward.1} parent=5 // pred_fallthru
      _
    %p187 = scmp.le.s32.totalorder 1, %s11
    %p188 = scmp.lt.s32.totalorder %s11, 3
    %p189 = pnand %p187, %p188
    %p190 = pneg %p189
    // Predicated region
    $region37: #{ann_forward.1} parent=5 // pred_check
      _
    $region38: #{ann_forward.1} parent=5 // pred_check_branch
      %192 = sbr.rel (%p189) target = $region40
    $region39: #{ann_forward.1} parent=5 // pred_region
      %s193 = ssub.s32 %s11, 1
      %s194 = smul.u32 16, %s16
      %p195 = scmp.lt.s32.totalorder %s194, 31
      %s196 = scalar_select %p195, %s194, 31
      %s197 = smul.addr %s196, 8
      %s198 = scalar_lea.vmem %s0, %s197
      %p199 = pneg %p37
      %p200 = pneg %p34
      %p201 = pneg %p58
      %p202 = pneg %p55
      %p203 = pneg %p79
      %p204 = pneg %p76
      %p205 = pneg %p100
      %p206 = pneg %p97
      %p207 = pneg %p121
      %p208 = pneg %p118
      %p209 = pneg %p147
      %p210 = pneg %p144
      %s211 = smul.u32 16, %s16
      %p212 = scmp.lt.s32.totalorder %s211, 31
      %s213 = scalar_select %p212, %s211, 31
      %s214 = smul.addr %s213, 8
      %s215 = scalar_lea.vmem %s5, %s214
      %s216 = smul.u32 16, %s16
      %p217 = scmp.lt.s32.totalorder %s216, 31
      %s218 = scalar_select %p217, %s216, 31
      %s219 = smul.addr %s218, 8
      %s220 = scalar_lea.vmem %s0, %s219
      %s221 = smul.u32 16, %s16
      %s222 = smul.u32 16, %s16
      %p223 = scmp.lt.s32.totalorder %s222, 31
      %s224 = scalar_select %p223, %s222, 31
      %s225 = smul.addr %s224, 8
      %s226 = scalar_lea.vmem %s5, %s225
      %s227 = smul.u32 16, %s16
      %v228 = vld [vmem:[%s220] sm:$0xff]
      %v229 = vld [vmem:[%s220 + $0x8] sm:$0xff]
      %v230 = vld [vmem:[%s220 + $0x10] sm:$0xff]
      %v231 = vld [vmem:[%s220 + $0x18] sm:$0xff]
      %v232 = vld [vmem:[%s220 + $0x20] sm:$0xff]
      %v233 = vld [vmem:[%s220 + $0x28] sm:$0xff]
      %v234 = vld [vmem:[%s220 + $0x30] sm:$0xff]
      %v235 = vld [vmem:[%s220 + $0x38] sm:$0xff]
      %v236 = vld [vmem:[%s220 + $0x40] sm:$0xff]
      %v237 = vld [vmem:[%s220 + $0x48] sm:$0xff]
      %v238 = vld [vmem:[%s220 + $0x50] sm:$0xff]
      %v239 = vld [vmem:[%s220 + $0x58] sm:$0xff]
      %v240 = vld [vmem:[%s220 + $0x60] sm:$0xff]
      %v241 = vld [vmem:[%s220 + $0x68] sm:$0xff]
      %v242 = vld [vmem:[%s220 + $0x70] sm:$0xff]
      %v243 = vld [vmem:[%s220 + $0x78] sm:$0xff]
      %v244 = vld [vmem:[%s1] sm:$0xff]
      %v245 = vld [vmem:[%s1 + $0x8] sm:$0xff]
      %v246 = vld [vmem:[%s1 + $0x10] sm:$0xff]
      %v247 = vld [vmem:[%s1 + $0x18] sm:$0xff]
      %v248 = vld [vmem:[%s2] sm:$0x1]
      %v250 = vlaneseq
      %v251 = vshrl.u32 %v250, 7
      %v252 = vsub.s32 0, %v251
      %v253 = vrot.slane %v248, %v252
      %vm255 = vcmask 261120
      %v257 = vsel %vm255, %v228, 0
      %v260 = vsel %vm255, %v229, 0
      %v263 = vsel %vm255, %v230, 0
      %v266 = vsel %vm255, %v231, 0
      %v269 = vsel %vm255, %v232, 0
      %v272 = vsel %vm255, %v233, 0
      %v275 = vsel %vm255, %v234, 0
      %v278 = vsel %vm255, %v235, 0
      %v281 = vsel %vm255, %v236, 0
      %v284 = vsel %vm255, %v237, 0
      %v287 = vsel %vm255, %v238, 0
      %v290 = vsel %vm255, %v239, 0
      %v293 = vsel %vm255, %v240, 0
      %v296 = vsel %vm255, %v241, 0
      %v299 = vsel %vm255, %v242, 0
      %v302 = vsel %vm255, %v243, 0
      %304 = vmatprep.subr.mxu0 0.0
      %305 = vmatpush1.msra.mxu0 %v244
      %306 = vmatprep.subr.mxu0 0.0
      %307 = vmatpush1.msra.mxu0 %v245
      %308 = vmatprep.subr.mxu0 0.0
      %309 = vmatpush1.msra.mxu0 %v246
      %310 = vmatprep.subr.mxu0 0.0
      %311 = vmatpush1.msra.mxu0 %v247
      %312 = vmatprep.subr.mxu0 0.0
      %313 = vmatpush1.msra.mxu0 0.0
      %314 = vmatprep.subr.mxu0 0.0
      %315 = vmatpush1.msra.mxu0 0.0
      %316 = vmatprep.subr.mxu0 0.0
      %317 = vmatpush1.msra.mxu0 0.0
      %318 = vmatprep.subr.mxu0 0.0
      %319 = vmatpush1.msra.mxu0 0.0
      %320 = vmatprep.subr.mxu0 0.0
      %321 = vmatpush1.msra.mxu0 0.0
      %322 = vmatprep.subr.mxu0 0.0
      %323 = vmatpush1.msra.mxu0 0.0
      %324 = vmatprep.subr.mxu0 0.0
      %325 = vmatpush1.msra.mxu0 0.0
      %326 = vmatprep.subr.mxu0 0.0
      %327 = vmatpush1.msra.mxu0 0.0
      %328 = vmatprep.subr.mxu0 0.0
      %329 = vmatpush1.msra.mxu0 0.0
      %330 = vmatprep.subr.mxu0 0.0
      %331 = vmatpush1.msra.mxu0 0.0
      %332 = vmatprep.subr.mxu0 0.0
      %333 = vmatpush1.msra.mxu0 0.0
      %334 = vmatprep.subr.mxu0 0.0
      %335 = vmatpush1.msra.mxu0 0.0
      %336 = vmatprep.subr.mxu0 0.0
      %337 = vmatpush1.msra.mxu0 0.0
      %338 = vmatprep.subr.mxu0 0.0
      %339 = vmatpush1.msra.mxu0 0.0
      %340 = vmatprep.subr.mxu0 0.0
      %341 = vmatpush1.msra.mxu0 0.0
      %342 = vmatprep.subr.mxu0 0.0
      %343 = vmatpush1.msra.mxu0 0.0
      %344 = vmatprep.subr.mxu0 0.0
      %345 = vmatpush1.msra.mxu0 0.0
      %346 = vmatprep.subr.mxu0 0.0
      %347 = vmatpush1.msra.mxu0 0.0
      %348 = vmatprep.subr.mxu0 0.0
      %349 = vmatpush1.msra.mxu0 0.0
      %350 = vmatprep.subr.mxu0 0.0
      %351 = vmatpush1.msra.mxu0 0.0
      %352 = vmatprep.subr.mxu0 0.0
      %353 = vmatpush1.msra.mxu0 0.0
      %354 = vmatprep.subr.mxu0 0.0
      %355 = vmatpush1.msra.mxu0 0.0
      %356 = vmatprep.subr.mxu0 0.0
      %357 = vmatpush1.msra.mxu0 0.0
      %358 = vmatprep.subr.mxu0 0.0
      %359 = vmatpush1.msra.mxu0 0.0
      %360 = vmatprep.subr.mxu0 0.0
      %361 = vmatpush1.msra.mxu0 0.0
      %362 = vmatprep.subr.mxu0 0.0
      %363 = vmatpush1.msra.mxu0 0.0
      %364 = vmatprep.subr.mxu0 0.0
      %365 = vmatpush1.msra.mxu0 0.0
      %366 = vmatprep.subr.mxu0 0.0
      %367 = vmatpush1.msra.mxu0 0.0
      %368 = vmatprep.mubr.f32.mxu0 0.0
      %369 = vmatmul.mubr.f32.gmra.mrb[0].mxu0 %v257
      %v370 = vpop.f32.mrb[0].mxu0
      %v371 = vadd.f32 %v253, %v370
      %v372 = vpop.f32.mrb[0].mxu0
      %373 = vmatprep.mubr.f32.mxu0 0.0
      %374 = vmatmul.mubr.f32.gmra.mrb[0].mxu0 %v260
      %v375 = vpop.f32.mrb[0].mxu0
      %v376 = vadd.f32 %v253, %v375
      %v377 = vpop.f32.mrb[0].mxu0
      %378 = vmatprep.mubr.f32.mxu0 0.0
      %379 = vmatmul.mubr.f32.gmra.mrb[0].mxu0 %v263
      %v380 = vpop.f32.mrb[0].mxu0
      %v381 = vadd.f32 %v253, %v380
      %v382 = vpop.f32.mrb[0].mxu0
      %383 = vmatprep.mubr.f32.mxu0 0.0
      %384 = vmatmul.mubr.f32.gmra.mrb[0].mxu0 %v266
      %v385 = vpop.f32.mrb[0].mxu0
      %v386 = vadd.f32 %v253, %v385
      %v387 = vpop.f32.mrb[0].mxu0
      %388 = vmatprep.mubr.f32.mxu0 0.0
      %389 = vmatmul.mubr.f32.gmra.mrb[0].mxu0 %v269
      %v390 = vpop.f32.mrb[0].mxu0
      %v391 = vadd.f32 %v253, %v390
      %v392 = vpop.f32.mrb[0].mxu0
      %393 = vmatprep.mubr.f32.mxu0 0.0
      %394 = vmatmul.mubr.f32.gmra.mrb[0].mxu0 %v272
      %v395 = vpop.f32.mrb[0].mxu0
      %v396 = vadd.f32 %v253, %v395
      %v397 = vpop.f32.mrb[0].mxu0
      %398 = vmatprep.mubr.f32.mxu0 0.0
      %399 = vmatmul.mubr.f32.gmra.mrb[0].mxu0 %v275
      %v400 = vpop.f32.mrb[0].mxu0
      %v401 = vadd.f32 %v253, %v400
      %v402 = vpop.f32.mrb[0].mxu0
      %403 = vmatprep.mubr.f32.mxu0 0.0
      %404 = vmatmul.mubr.f32.gmra.mrb[0].mxu0 %v278
      %v405 = vpop.f32.mrb[0].mxu0
      %v406 = vadd.f32 %v253, %v405
      %v407 = vpop.f32.mrb[0].mxu0
      %408 = vmatprep.mubr.f32.mxu0 0.0
      %409 = vmatmul.mubr.f32.gmra.mrb[0].mxu0 %v281
      %v410 = vpop.f32.mrb[0].mxu0
      %v411 = vadd.f32 %v253, %v410
      %v412 = vpop.f32.mrb[0].mxu0
      %413 = vmatprep.mubr.f32.mxu0 0.0
      %414 = vmatmul.mubr.f32.gmra.mrb[0].mxu0 %v284
      %v415 = vpop.f32.mrb[0].mxu0
      %v416 = vadd.f32 %v253, %v415
      %v417 = vpop.f32.mrb[0].mxu0
      %418 = vmatprep.mubr.f32.mxu0 0.0
      %419 = vmatmul.mubr.f32.gmra.mrb[0].mxu0 %v287
      %v420 = vpop.f32.mrb[0].mxu0
      %v421 = vadd.f32 %v253, %v420
      %v422 = vpop.f32.mrb[0].mxu0
      %423 = vmatprep.mubr.f32.mxu0 0.0
      %424 = vmatmul.mubr.f32.gmra.mrb[0].mxu0 %v290
      %v425 = vpop.f32.mrb[0].mxu0
      %v426 = vadd.f32 %v253, %v425
      %v427 = vpop.f32.mrb[0].mxu0
      %428 = vmatprep.mubr.f32.mxu0 0.0
      %429 = vmatmul.mubr.f32.gmra.mrb[0].mxu0 %v293
      %v430 = vpop.f32.mrb[0].mxu0
      %v431 = vadd.f32 %v253, %v430
      %v432 = vpop.f32.mrb[0].mxu0
      %433 = vmatprep.mubr.f32.mxu0 0.0
      %434 = vmatmul.mubr.f32.gmra.mrb[0].mxu0 %v296
      %v435 = vpop.f32.mrb[0].mxu0
      %v436 = vadd.f32 %v253, %v435
      %v437 = vpop.f32.mrb[0].mxu0
      %438 = vmatprep.mubr.f32.mxu0 0.0
      %439 = vmatmul.mubr.f32.gmra.mrb[0].mxu0 %v299
      %v440 = vpop.f32.mrb[0].mxu0
      %v441 = vadd.f32 %v253, %v440
      %v442 = vpop.f32.mrb[0].mxu0
      %443 = vmatprep.mubr.f32.mxu0 0.0
      %444 = vmatmul.mubr.f32.gmra.mrb[0].mxu0 %v302
      %v445 = vpop.f32.mrb[0].mxu0
      %v446 = vadd.f32 %v253, %v445
      %v447 = vpop.f32.mrb[0].mxu0
      %448 = vdwg.mxu0
      %v449 = vmax.f32 %v371, 0.0
      %v450 = vmax.f32 %v376, 0.0
      %v451 = vmax.f32 %v381, 0.0
      %v452 = vmax.f32 %v386, 0.0
      %v453 = vmax.f32 %v391, 0.0
      %v454 = vmax.f32 %v396, 0.0
      %v455 = vmax.f32 %v401, 0.0
      %v456 = vmax.f32 %v406, 0.0
      %v457 = vmax.f32 %v411, 0.0
      %v458 = vmax.f32 %v416, 0.0
      %v459 = vmax.f32 %v421, 0.0
      %v460 = vmax.f32 %v426, 0.0
      %v461 = vmax.f32 %v431, 0.0
      %v462 = vmax.f32 %v436, 0.0
      %v463 = vmax.f32 %v441, 0.0
      %v464 = vmax.f32 %v446, 0.0
      %v465 = vld [vmem:[%s3] sm:$0xff]
      %v466 = vld [vmem:[%s3 + $0x8] sm:$0xff]
      %v467 = vld [vmem:[%s3 + $0x10] sm:$0xff]
      %v468 = vld [vmem:[%s3 + $0x18] sm:$0xff]
      %v469 = vld [vmem:[%s4] sm:$0x1]
      %v471 = vlaneseq
      %v472 = vshrl.u32 %v471, 7
      %v473 = vsub.s32 0, %v472
      %v474 = vrot.slane %v469, %v473
      %v477 = vsel %vm255, %v449, 0
      %v480 = vsel %vm255, %v450, 0
      %v483 = vsel %vm255, %v451, 0
      %v486 = vsel %vm255, %v452, 0
      %v489 = vsel %vm255, %v453, 0
      %v492 = vsel %vm255, %v454, 0
      %v495 = vsel %vm255, %v455, 0
      %v498 = vsel %vm255, %v456, 0
      %v501 = vsel %vm255, %v457, 0
      %v504 = vsel %vm255, %v458, 0
      %v507 = vsel %vm255, %v459, 0
      %v510 = vsel %vm255, %v460, 0
      %v513 = vsel %vm255, %v461, 0
      %v516 = vsel %vm255, %v462, 0
      %v519 = vsel %vm255, %v463, 0
      %v522 = vsel %vm255, %v464, 0
      %524 = vmatprep.subr.mxu0 0.0
      %525 = vmatpush1.msra.mxu0 %v465
      %526 = vmatprep.subr.mxu0 0.0
      %527 = vmatpush1.msra.mxu0 %v466
      %528 = vmatprep.subr.mxu0 0.0
      %529 = vmatpush1.msra.mxu0 %v467
      %530 = vmatprep.subr.mxu0 0.0
      %531 = vmatpush1.msra.mxu0 %v468
      %532 = vmatprep.subr.mxu0 0.0
      %533 = vmatpush1.msra.mxu0 0.0
      %534 = vmatprep.subr.mxu0 0.0
      %535 = vmatpush1.msra.mxu0 0.0
      %536 = vmatprep.subr.mxu0 0.0
      %537 = vmatpush1.msra.mxu0 0.0
      %538 = vmatprep.subr.mxu0 0.0
      %539 = vmatpush1.msra.mxu0 0.0
      %540 = vmatprep.subr.mxu0 0.0
      %541 = vmatpush1.msra.mxu0 0.0
      %542 = vmatprep.subr.mxu0 0.0
      %543 = vmatpush1.msra.mxu0 0.0
      %544 = vmatprep.subr.mxu0 0.0
      %545 = vmatpush1.msra.mxu0 0.0
      %546 = vmatprep.subr.mxu0 0.0
      %547 = vmatpush1.msra.mxu0 0.0
      %548 = vmatprep.subr.mxu0 0.0
      %549 = vmatpush1.msra.mxu0 0.0
      %550 = vmatprep.subr.mxu0 0.0
      %551 = vmatpush1.msra.mxu0 0.0
      %552 = vmatprep.subr.mxu0 0.0
      %553 = vmatpush1.msra.mxu0 0.0
      %554 = vmatprep.subr.mxu0 0.0
      %555 = vmatpush1.msra.mxu0 0.0
      %556 = vmatprep.subr.mxu0 0.0
      %557 = vmatpush1.msra.mxu0 0.0
      %558 = vmatprep.subr.mxu0 0.0
      %559 = vmatpush1.msra.mxu0 0.0
      %560 = vmatprep.subr.mxu0 0.0
      %561 = vmatpush1.msra.mxu0 0.0
      %562 = vmatprep.subr.mxu0 0.0
      %563 = vmatpush1.msra.mxu0 0.0
      %564 = vmatprep.subr.mxu0 0.0
      %565 = vmatpush1.msra.mxu0 0.0
      %566 = vmatprep.subr.mxu0 0.0
      %567 = vmatpush1.msra.mxu0 0.0
      %568 = vmatprep.subr.mxu0 0.0
      %569 = vmatpush1.msra.mxu0 0.0
      %570 = vmatprep.subr.mxu0 0.0
      %571 = vmatpush1.msra.mxu0 0.0
      %572 = vmatprep.subr.mxu0 0.0
      %573 = vmatpush1.msra.mxu0 0.0
      %574 = vmatprep.subr.mxu0 0.0
      %575 = vmatpush1.msra.mxu0 0.0
      %576 = vmatprep.subr.mxu0 0.0
      %577 = vmatpush1.msra.mxu0 0.0
      %578 = vmatprep.subr.mxu0 0.0
      %579 = vmatpush1.msra.mxu0 0.0
      %580 = vmatprep.subr.mxu0 0.0
      %581 = vmatpush1.msra.mxu0 0.0
      %582 = vmatprep.subr.mxu0 0.0
      %583 = vmatpush1.msra.mxu0 0.0
      %584 = vmatprep.subr.mxu0 0.0
      %585 = vmatpush1.msra.mxu0 0.0
      %586 = vmatprep.subr.mxu0 0.0
      %587 = vmatpush1.msra.mxu0 0.0
      %588 = vmatprep.mubr.f32.mxu0 0.0
      %589 = vmatmul.mubr.f32.gmra.mrb[0].mxu0 %v477
      %v590 = vpop.f32.mrb[0].mxu0
      %v591 = vadd.f32 %v474, %v590
      %v592 = vpop.f32.mrb[0].mxu0
      %593 = vmatprep.mubr.f32.mxu0 0.0
      %594 = vmatmul.mubr.f32.gmra.mrb[0].mxu0 %v480
      %v595 = vpop.f32.mrb[0].mxu0
      %v596 = vadd.f32 %v474, %v595
      %v597 = vpop.f32.mrb[0].mxu0
      %598 = vmatprep.mubr.f32.mxu0 0.0
      %599 = vmatmul.mubr.f32.gmra.mrb[0].mxu0 %v483
      %v600 = vpop.f32.mrb[0].mxu0
      %v601 = vadd.f32 %v474, %v600
      %v602 = vpop.f32.mrb[0].mxu0
      %603 = vmatprep.mubr.f32.mxu0 0.0
      %604 = vmatmul.mubr.f32.gmra.mrb[0].mxu0 %v486
      %v605 = vpop.f32.mrb[0].mxu0
      %v606 = vadd.f32 %v474, %v605
      %v607 = vpop.f32.mrb[0].mxu0
      %608 = vmatprep.mubr.f32.mxu0 0.0
      %609 = vmatmul.mubr.f32.gmra.mrb[0].mxu0 %v489
      %v610 = vpop.f32.mrb[0].mxu0
      %v611 = vadd.f32 %v474, %v610
      %v612 = vpop.f32.mrb[0].mxu0
      %613 = vmatprep.mubr.f32.mxu0 0.0
      %614 = vmatmul.mubr.f32.gmra.mrb[0].mxu0 %v492
      %v615 = vpop.f32.mrb[0].mxu0
      %v616 = vadd.f32 %v474, %v615
      %v617 = vpop.f32.mrb[0].mxu0
      %618 = vmatprep.mubr.f32.mxu0 0.0
      %619 = vmatmul.mubr.f32.gmra.mrb[0].mxu0 %v495
      %v620 = vpop.f32.mrb[0].mxu0
      %v621 = vadd.f32 %v474, %v620
      %v622 = vpop.f32.mrb[0].mxu0
      %623 = vmatprep.mubr.f32.mxu0 0.0
      %624 = vmatmul.mubr.f32.gmra.mrb[0].mxu0 %v498
      %v625 = vpop.f32.mrb[0].mxu0
      %v626 = vadd.f32 %v474, %v625
      %v627 = vpop.f32.mrb[0].mxu0
      %628 = vmatprep.mubr.f32.mxu0 0.0
      %629 = vmatmul.mubr.f32.gmra.mrb[0].mxu0 %v501
      %v630 = vpop.f32.mrb[0].mxu0
      %v631 = vadd.f32 %v474, %v630
      %v632 = vpop.f32.mrb[0].mxu0
      %633 = vmatprep.mubr.f32.mxu0 0.0
      %634 = vmatmul.mubr.f32.gmra.mrb[0].mxu0 %v504
      %v635 = vpop.f32.mrb[0].mxu0
      %v636 = vadd.f32 %v474, %v635
      %v637 = vpop.f32.mrb[0].mxu0
      %638 = vmatprep.mubr.f32.mxu0 0.0
      %639 = vmatmul.mubr.f32.gmra.mrb[0].mxu0 %v507
      %v640 = vpop.f32.mrb[0].mxu0
      %v641 = vadd.f32 %v474, %v640
      %v642 = vpop.f32.mrb[0].mxu0
      %643 = vmatprep.mubr.f32.mxu0 0.0
      %644 = vmatmul.mubr.f32.gmra.mrb[0].mxu0 %v510
      %v645 = vpop.f32.mrb[0].mxu0
      %v646 = vadd.f32 %v474, %v645
      %v647 = vpop.f32.mrb[0].mxu0
      %648 = vmatprep.mubr.f32.mxu0 0.0
      %649 = vmatmul.mubr.f32.gmra.mrb[0].mxu0 %v513
      %v650 = vpop.f32.mrb[0].mxu0
      %v651 = vadd.f32 %v474, %v650
      %v652 = vpop.f32.mrb[0].mxu0
      %653 = vmatprep.mubr.f32.mxu0 0.0
      %654 = vmatmul.mubr.f32.gmra.mrb[0].mxu0 %v516
      %v655 = vpop.f32.mrb[0].mxu0
      %v656 = vadd.f32 %v474, %v655
      %v657 = vpop.f32.mrb[0].mxu0
      %658 = vmatprep.mubr.f32.mxu0 0.0
      %659 = vmatmul.mubr.f32.gmra.mrb[0].mxu0 %v519
      %v660 = vpop.f32.mrb[0].mxu0
      %v661 = vadd.f32 %v474, %v660
      %v662 = vpop.f32.mrb[0].mxu0
      %663 = vmatprep.mubr.f32.mxu0 0.0
      %664 = vmatmul.mubr.f32.gmra.mrb[0].mxu0 %v522
      %v665 = vpop.f32.mrb[0].mxu0
      %v666 = vadd.f32 %v474, %v665
      %v667 = vpop.f32.mrb[0].mxu0
      %668 = vdwg.mxu0
      %v669 = vxor.u32 %v591, 2147483648
      %v670 = vxor.u32 %v596, 2147483648
      %v671 = vxor.u32 %v601, 2147483648
      %v672 = vxor.u32 %v606, 2147483648
      %v673 = vxor.u32 %v611, 2147483648
      %v674 = vxor.u32 %v616, 2147483648
      %v675 = vxor.u32 %v621, 2147483648
      %v676 = vxor.u32 %v626, 2147483648
      %v677 = vxor.u32 %v631, 2147483648
      %v678 = vxor.u32 %v636, 2147483648
      %v679 = vxor.u32 %v641, 2147483648
      %v680 = vxor.u32 %v646, 2147483648
      %v681 = vxor.u32 %v651, 2147483648
      %v682 = vxor.u32 %v656, 2147483648
      %v683 = vxor.u32 %v661, 2147483648
      %v684 = vxor.u32 %v666, 2147483648
      %v685 = vmul.f32 %v669, 1.442695
      %v686 = vpow.pop %v685
      %v687 = vmul.f32 %v670, 1.442695
      %v688 = vpow.pop %v687
      %v689 = vmul.f32 %v671, 1.442695
      %v690 = vpow.pop %v689
      %v691 = vmul.f32 %v672, 1.442695
      %v692 = vpow.pop %v691
      %v693 = vmul.f32 %v673, 1.442695
      %v694 = vpow.pop %v693
      %v695 = vmul.f32 %v674, 1.442695
      %v696 = vpow.pop %v695
      %v697 = vmul.f32 %v675, 1.442695
      %v698 = vpow.pop %v697
      %v699 = vmul.f32 %v676, 1.442695
      %v700 = vpow.pop %v699
      %v701 = vmul.f32 %v677, 1.442695
      %v702 = vpow.pop %v701
      %v703 = vmul.f32 %v678, 1.442695
      %v704 = vpow.pop %v703
      %v705 = vmul.f32 %v679, 1.442695
      %v706 = vpow.pop %v705
      %v707 = vmul.f32 %v680, 1.442695
      %v708 = vpow.pop %v707
      %v709 = vmul.f32 %v681, 1.442695
      %v710 = vpow.pop %v709
      %v711 = vmul.f32 %v682, 1.442695
      %v712 = vpow.pop %v711
      %v713 = vmul.f32 %v683, 1.442695
      %v714 = vpow.pop %v713
      %v715 = vmul.f32 %v684, 1.442695
      %v716 = vpow.pop %v715
      %v717 = vadd.f32 %v686, 1.0
      %v718 = vadd.f32 %v688, 1.0
      %v719 = vadd.f32 %v690, 1.0
      %v720 = vadd.f32 %v692, 1.0
      %v721 = vadd.f32 %v694, 1.0
      %v722 = vadd.f32 %v696, 1.0
      %v723 = vadd.f32 %v698, 1.0
      %v724 = vadd.f32 %v700, 1.0
      %v725 = vadd.f32 %v702, 1.0
      %v726 = vadd.f32 %v704, 1.0
      %v727 = vadd.f32 %v706, 1.0
      %v728 = vadd.f32 %v708, 1.0
      %v729 = vadd.f32 %v710, 1.0
      %v730 = vadd.f32 %v712, 1.0
      %v731 = vadd.f32 %v714, 1.0
      %v732 = vadd.f32 %v716, 1.0
      %v733 = vrcp.pop %v717
      %v734 = vmul.f32 1.0, %v733
      %v735 = vrcp.pop %v718
      %v736 = vmul.f32 1.0, %v735
      %v737 = vrcp.pop %v719
      %v738 = vmul.f32 1.0, %v737
      %v739 = vrcp.pop %v720
      %v740 = vmul.f32 1.0, %v739
      %v741 = vrcp.pop %v721
      %v742 = vmul.f32 1.0, %v741
      %v743 = vrcp.pop %v722
      %v744 = vmul.f32 1.0, %v743
      %v745 = vrcp.pop %v723
      %v746 = vmul.f32 1.0, %v745
      %v747 = vrcp.pop %v724
      %v748 = vmul.f32 1.0, %v747
      %v749 = vrcp.pop %v725
      %v750 = vmul.f32 1.0, %v749
      %v751 = vrcp.pop %v726
      %v752 = vmul.f32 1.0, %v751
      %v753 = vrcp.pop %v727
      %v754 = vmul.f32 1.0, %v753
      %v755 = vrcp.pop %v728
      %v756 = vmul.f32 1.0, %v755
      %v757 = vrcp.pop %v729
      %v758 = vmul.f32 1.0, %v757
      %v759 = vrcp.pop %v730
      %v760 = vmul.f32 1.0, %v759
      %v761 = vrcp.pop %v731
      %v762 = vmul.f32 1.0, %v761
      %v763 = vrcp.pop %v732
      %v764 = vmul.f32 1.0, %v763
      %vm765 = vcmask 130048
      %766 = vst.msk [vmem:[%s226] sm:$0xff] %vm765, %v734
      %767 = vst.msk [vmem:[%s226 + $0x8] sm:$0xff] %vm765, %v736
      %768 = vst.msk [vmem:[%s226 + $0x10] sm:$0xff] %vm765, %v738
      %769 = vst.msk [vmem:[%s226 + $0x18] sm:$0xff] %vm765, %v740
      %770 = vst.msk [vmem:[%s226 + $0x20] sm:$0xff] %vm765, %v742
      %771 = vst.msk [vmem:[%s226 + $0x28] sm:$0xff] %vm765, %v744
      %772 = vst.msk [vmem:[%s226 + $0x30] sm:$0xff] %vm765, %v746
      %773 = vst.msk [vmem:[%s226 + $0x38] sm:$0xff] %vm765, %v748
      %774 = vst.msk [vmem:[%s226 + $0x40] sm:$0xff] %vm765, %v750
      %775 = vst.msk [vmem:[%s226 + $0x48] sm:$0xff] %vm765, %v752
      %776 = vst.msk [vmem:[%s226 + $0x50] sm:$0xff] %vm765, %v754
      %777 = vst.msk [vmem:[%s226 + $0x58] sm:$0xff] %vm765, %v756
      %778 = vst.msk [vmem:[%s226 + $0x60] sm:$0xff] %vm765, %v758
      %779 = vst.msk [vmem:[%s226 + $0x68] sm:$0xff] %vm765, %v760
      %780 = vst.msk [vmem:[%s226 + $0x70] sm:$0xff] %vm765, %v762
      %781 = vst.msk [vmem:[%s226 + $0x78] sm:$0xff] %vm765, %v764
      %s782 = smul.u32 16, %s16
      %p783 = scmp.lt.s32.totalorder %s782, 31
      %s784 = scalar_select %p783, %s782, 31
      %s785 = smul.addr %s784, 8
      %s786 = scalar_lea.vmem %s5, %s785
      // Predicated region
      $region41: #{ann_forward.1} parent=39 // pred_check
        %p787 = pneg %p144
      $region42: #{ann_forward.1} parent=39 // pred_check_branch
        %789 = sbr.rel (%p787) target = $region44
      $region43: #{ann_forward.1} parent=39 // pred_region
        %s790 = smul.u32 16, %s16
      $region44: #{ann_forward.1} parent=39 // pred_fallthru
        _
    $region40: #{ann_forward.1} parent=5 // pred_fallthru
      _
    %p791 = scmp.le.s32.totalorder 2, %s11
    // Predicated region
    $region45: #{ann_forward.1} parent=5 // pred_check
      %p792 = pneg %p791
    $region46: #{ann_forward.1} parent=5 // pred_check_branch
      %794 = sbr.rel (%p792) target = $region48
    $region47: #{ann_forward.1} parent=5 // pred_region
      %s795 = ssub.s32 %s11, 2
      // Predicated region
      $region49: #{ann_forward.1} parent=47 // pred_check
        %p796 = pneg %p150
      $region50: #{ann_forward.1} parent=47 // pred_check_branch
        %798 = sbr.rel (%p796) target = $region52
      $region51: #{ann_forward.1} parent=47 // pred_region
        %s799 = smul.u32 16, %s17
        %p800 = scmp.lt.s32.totalorder %s799, 31
        %s801 = scalar_select %p800, %s799, 31
        %s802 = smul.addr %s801, 8
        %s803 = scalar_lea.vmem %s5, %s802
      $region52: #{ann_forward.1} parent=47 // pred_fallthru
        _
    $region48: #{ann_forward.1} parent=5 // pred_fallthru
      _
  $region6: #{ann_forward.1} parent=0 // loop_footer
    %s15 = sadd.s32 1, %s11
  $region7: #{ann_forward.1} parent=0 // loop_footer_branch
    %10 = sbr.rel target = $region3
  $region8: #{ann_forward.1} parent=0 // loop_exit
    _

</llo_original>
